<compile_context>
chip_gen: v6e
topology: v6e:2x2x1
jax: 0.10.0
libtpu: 0.0.40
codegen_flags: <defaults>
</compile_context>

<pallas_src>
import math

import jax
import jax.numpy as jnp
from jax.experimental import pallas as pl
from jax.experimental.pallas import tpu as pltpu


# ----------------------------- frequency generators ---------------------------
def linear_frequencies(encoding_period, n_frequencies):
    return (2.0 * jnp.pi
            * jnp.arange(1, 1 + n_frequencies, dtype=jnp.float32) / encoding_period)


def geometric_frequencies(encoding_period, n_frequencies):
    exponent = jnp.arange(n_frequencies, 0, -1, dtype=jnp.float32) / n_frequencies
    return 2.0 * jnp.pi * jnp.power(1.0 / encoding_period, exponent)


def generate_frequencies(encoding_period, n_frequencies, encoding_frequencies="linear"):
    if encoding_frequencies == "linear":
        return linear_frequencies(encoding_period, n_frequencies)
    elif encoding_frequencies == "geometric":
        return geometric_frequencies(encoding_period, n_frequencies)
    raise ValueError(f"Unknown frequency generator: {encoding_frequencies}")


# ----------------------------- Pallas kernel ----------------------------------
def rope_kernel(x_ref, pos_ref, m_ref, out_ref):
    """Interleaved rotary embedding on a lane-dense (TR, C) slab (C even).

    angle = pos_block @ M            (tiny matmul; MXU is otherwise idle)
    out[2i]   = cos(theta)*x[2i]   - sin(theta)*x[2i+1]
    out[2i+1] = cos(theta)*x[2i+1] + sin(theta)*x[2i]
    """
    x = x_ref[...].astype(jnp.float32)                         # (TR, C) f32 in-regs
    angle = jnp.dot(pos_ref[...], m_ref[...],
                    preferred_element_type=jnp.float32)        # (TR, C)
    c = jnp.cos(angle)
    s = jnp.sin(angle)

    C = x.shape[-1]
    # Pair swap along the lane axis: (x[2i], x[2i+1]) -> (-x[2i+1], x[2i]).
    # roll semantics match np.roll: roll(x, k)[i] == x[(i - k) % C].
    # Correct only because C is even (pairs never straddle a row / the wrap).
    x_next = pltpu.roll(x, shift=C - 1, axis=1)     # x_next[i] = x[(i + 1) % C]
    x_prev = pltpu.roll(x, shift=1, axis=1)         # x_prev[i] = x[(i - 1) % C]
    lane = jax.lax.broadcasted_iota(jnp.int32, x.shape, 1)
    is_even = (lane & 1) == 0
    x_swapped = jnp.where(is_even, -x_next, x_prev)            # single select

    out_ref[...] = (c * x + s * x_swapped).astype(out_ref.dtype)


# ----------------------------- wrapper -----------------------------------------
def rotary_positional_encoding(x, pos, *, encoding_period=1000.0,
                               n_dimensions=2, encoding_frequencies="linear",
                               row_tile=1024):
    orig_shape = x.shape
    E = x.shape[-1]
    n_dim = n_dimensions
    if E % (2 * n_dim) != 0:
        raise ValueError(
            f"Embedding dimension {E} must be divisible by 2 * n_dimensions")
    if pos.shape[-1] != n_dim or x.shape[:-1] != pos.shape[:-1]:
        raise ValueError("pos must have shape (*x.shape[:-1], n_dimensions)")

    n_freq = E // n_dim // 2
    freqs = generate_frequencies(encoding_period, n_freq, encoding_frequencies)

    # Constant per-embed-index frequency / segment expansion (matches the
    # repeat_interleave(2, dim=-1) + reshape(x.shape) layout of the reference):
    #   angle[..., e] = pos[..., e // (E//n_dim)] * freqs[(e % (E//n_dim)) // 2]
    per_dim = E // n_dim
    seg = jnp.arange(E, dtype=jnp.int32) // per_dim                     # (E,)
    freq_full = jnp.tile(jnp.repeat(freqs, 2), n_dim)                   # (E,)
    m_small = ((jnp.arange(n_dim, dtype=jnp.int32)[:, None] == seg[None, :])
               .astype(jnp.float32) * freq_full[None, :])               # (n_dim, E)

    # Lane-dense grouping: fold g consecutive embedding rows into one C-wide
    # lane row, C = g*E a multiple of 128 (unmasked full-lane loads/stores).
    g = 128 // math.gcd(E, 128)
    C = g * E
    assert C % 128 == 0 and C % 2 == 0   # pair swap relies on even row width

    rows = x.size // E
    rows_g_min = -(-rows // g)

    # Adaptive row tile: biggest that keeps each x/out buffer ~<= 2 MiB so the
    # double-buffered pipeline fits every generation's scoped-VMEM default
    # (16 MiB v5e / 32 MiB v6e/v7x), v7x's 64 MiB physical included.
    bytes_per_row = C * max(jnp.dtype(x.dtype).itemsize, 4)
    tr_cap = max(8, (2 * 1024 * 1024 // bytes_per_row) // 8 * 8)
    row_tile = min(row_tile, tr_cap)

    if rows_g_min <= row_tile:
        TR, n_tiles = rows_g_min, 1            # single block == full array dims
    else:
        TR = row_tile                          # multiple of 8
        n_tiles = -(-rows_g_min // TR)
    rows_g = n_tiles * TR
    rows_pad = rows_g * g

    x_flat = x.reshape(rows, E)
    pos_flat = pos.reshape(rows, n_dim).astype(jnp.float32)
    if rows_pad > rows:
        pad = rows_pad - rows
        x_flat = jnp.pad(x_flat, ((0, pad), (0, 0)))
        pos_flat = jnp.pad(pos_flat, ((0, pad), (0, 0)))

    x_slab = x_flat.reshape(rows_g, C)                                   # x.dtype
    gnd = g * n_dim
    pos_slab = pos_flat.reshape(rows_g, gnd)                             # compact
    m_full = jnp.kron(jnp.eye(g, dtype=jnp.float32), m_small)            # (gnd, C)

    # Pad the tiny reduction dim to a multiple of 8 sublanes (zero rows are inert).
    gnd_pad = -(-gnd // 8) * 8
    if gnd_pad > gnd:
        pos_slab = jnp.pad(pos_slab, ((0, 0), (0, gnd_pad - gnd)))
        m_full = jnp.pad(m_full, ((0, gnd_pad - gnd), (0, 0)))

    out = pl.pallas_call(
        rope_kernel,
        out_shape=jax.ShapeDtypeStruct((rows_g, C), x.dtype),
        grid=(n_tiles,),
        in_specs=[
            pl.BlockSpec((TR, C), lambda i: (i, 0)),          # x tile
            pl.BlockSpec((TR, gnd_pad), lambda i: (i, 0)),    # compact pos tile
            pl.BlockSpec((gnd_pad, C), lambda i: (0, 0)),     # constant expansion M
        ],
        out_specs=pl.BlockSpec((TR, C), lambda i: (i, 0)),
        compiler_params=pltpu.CompilerParams(
            dimension_semantics=("parallel",),                # shards tiles on v7x's 2 TCs
            vmem_limit_bytes=32 * 1024 * 1024,
        ),
    )(x_slab, pos_slab, m_full)

    out_flat = out.reshape(rows_pad, E)
    if rows_pad > rows:
        out_flat = out_flat[:rows]
    return out_flat.reshape(orig_shape)


# ----------------------------- pure-JAX reference --------------------------------
def rotary_ref(x, pos, *, encoding_period=1000.0, n_dimensions=2,
               encoding_frequencies="linear"):
    E = x.shape[-1]
    n_freq = E // n_dimensions // 2
    freqs = generate_frequencies(encoding_period, n_freq, encoding_frequencies)
    angle = pos.astype(jnp.float32)[..., None] * freqs[None, :]   # (..., n_dim, n_freq)
    angle = jnp.repeat(angle, 2, axis=-1)                         # repeat_interleave(2)
    angle = angle.reshape(x.shape)
    xr = x.astype(jnp.float32).reshape(*x.shape[:-1], E // 2, 2)
    x_swapped = jnp.stack([-xr[..., 1], xr[..., 0]], axis=-1).reshape(x.shape)
    return jnp.cos(angle) * x.astype(jnp.float32) + jnp.sin(angle) * x_swapped


# ----------------------------- main ----------------------------------------------
if __name__ == "__main__":
    B, N, E, n_dim = 2, 8, 32, 2

    key = jax.random.PRNGKey(0)
    kx, kp = jax.random.split(key)
    x = jax.random.normal(kx, (B, N, E), jnp.float32)
    pos = jax.random.uniform(kp, (B, N, n_dim), jnp.float32, 0.0, 10.0)

    out = jax.block_until_ready(rotary_positional_encoding(x, pos))
    ref = jax.block_until_ready(rotary_ref(x, pos))

    assert out.shape == (B, N, E)
    assert out.dtype == x.dtype
    max_err = float(jnp.max(jnp.abs(out.astype(jnp.float32) - ref)))
    assert jnp.allclose(out.astype(jnp.float32), ref, rtol=1e-4, atol=1e-4), max_err

    print("KERNEL_OK")
</pallas_src>

<mosaic_0001>
module attributes {stable_mosaic.version = 11 : i64} {
  func.func @rope_kernel(%arg0: i32, %arg1: memref<4x128xf32, #tpu.memory_space<vmem>>, %arg2: memref<4x8xf32, #tpu.memory_space<vmem>>, %arg3: memref<8x128xf32, #tpu.memory_space<vmem>>, %arg4: memref<4x128xf32, #tpu.memory_space<vmem>>) attributes {dimension_semantics = [#tpu.dimension_semantics<parallel>], iteration_bounds = array<i64: 1>, scalar_prefetch = 0 : i64, scratch_operands = 0 : i64, tpu.core_type = #tpu.core_type<tc>, window_params = [{transform_indices = @transform_0, window_bounds = array<i64: 4, 128>}, {transform_indices = @transform_1, window_bounds = array<i64: 4, 8>}, {pipeline_mode = #tpu.pipeline_mode<synchronous>, transform_indices = @transform_2, window_bounds = array<i64: 8, 128>}, {transform_indices = @transform_3, window_bounds = array<i64: 4, 128>}]} {
    %c0 = arith.constant 0 : index
    %c0_0 = arith.constant 0 : index
    %0 = vector.load %arg1[%c0, %c0_0] : memref<4x128xf32, #tpu.memory_space<vmem>>, vector<4x128xf32>
    %c0_1 = arith.constant 0 : index
    %c0_2 = arith.constant 0 : index
    %1 = vector.load %arg2[%c0_1, %c0_2] : memref<4x8xf32, #tpu.memory_space<vmem>>, vector<4x8xf32>
    %c0_3 = arith.constant 0 : index
    %c0_4 = arith.constant 0 : index
    %2 = vector.load %arg3[%c0_3, %c0_4] : memref<8x128xf32, #tpu.memory_space<vmem>>, vector<8x128xf32>
    %cst = arith.constant dense<0.000000e+00> : vector<4x128xf32>
    %3 = tpu.matmul %1, %2, %cst {dimension_numbers = #tpu.dot_dimension_numbers<[1], [0], [0], [1], [0, 0, 1, 1], [], []>} : vector<4x8xf32>, vector<8x128xf32>, vector<4x128xf32> -> vector<4x128xf32>
    %4 = math.cos %3 : vector<4x128xf32>
    %5 = math.sin %3 : vector<4x128xf32>
    %c127_i32 = arith.constant 127 : i32
    %6 = tpu.dynamic_rotate %0 by %c127_i32 dim 1 : vector<4x128xf32>, i32 -> vector<4x128xf32>
    %c1_i32 = arith.constant 1 : i32
    %7 = tpu.dynamic_rotate %0 by %c1_i32 dim 1 : vector<4x128xf32>, i32 -> vector<4x128xf32>
    %8 = tpu.iota {dimensions = array<i32: 1>} : vector<4x128xi32>
    %c1_i32_5 = arith.constant 1 : i32
    %9 = vector.broadcast %c1_i32_5 : i32 to vector<4x128xi32>
    %10 = arith.andi %8, %9 : vector<4x128xi32>
    %c0_i32 = arith.constant 0 : i32
    %11 = vector.broadcast %c0_i32 : i32 to vector<4x128xi32>
    %12 = arith.cmpi eq, %10, %11 : vector<4x128xi32>
    %cst_6 = arith.constant 0.000000e+00 : f32
    %13 = vector.broadcast %cst_6 : f32 to vector<4x128xf32>
    %14 = arith.subf %13, %6 : vector<4x128xf32>
    %15 = arith.select %12, %14, %7 : vector<4x128xi1>, vector<4x128xf32>
    %16 = arith.mulf %4, %0 : vector<4x128xf32>
    %17 = arith.mulf %5, %15 : vector<4x128xf32>
    %18 = arith.addf %16, %17 : vector<4x128xf32>
    %c0_7 = arith.constant 0 : index
    %c0_8 = arith.constant 0 : index
    %19 = vector.load %arg4[%c0_7, %c0_8] : memref<4x128xf32, #tpu.memory_space<vmem>>, vector<4x128xf32>
    tpu.vector_store %arg4[%c0_7, %c0_8], %18 {strides = array<i32>} : memref<4x128xf32, #tpu.memory_space<vmem>>, vector<4x128xf32>,
    return
  }
  func.func @transform_0(%arg0: i32) -> (i32, i32) {
    %c0_i32 = arith.constant 0 : i32
    %c0_i32_0 = arith.constant 0 : i32
    return %arg0, %c0_i32 : i32, i32
  }
  func.func @transform_1(%arg0: i32) -> (i32, i32) {
    %c0_i32 = arith.constant 0 : i32
    %c0_i32_0 = arith.constant 0 : i32
    return %arg0, %c0_i32 : i32, i32
  }
  func.func @transform_2(%arg0: i32) -> (i32, i32) {
    %c0_i32 = arith.constant 0 : i32
    %c0_i32_0 = arith.constant 0 : i32
    %c0_i32_1 = arith.constant 0 : i32
    return %c0_i32, %c0_i32_0 : i32, i32
  }
  func.func @transform_3(%arg0: i32) -> (i32, i32) {
    %c0_i32 = arith.constant 0 : i32
    %c0_i32_0 = arith.constant 0 : i32
    return %arg0, %c0_i32 : i32, i32
  }
}

</mosaic_0001>

<llo_original>
// kernel: tpu_custom_call.1
$region0: #{tpu_custom_call.1}
  #allocation0 [shape = 'u32[]', space=smem, size = 0x4, offset = 0x4, fixed_abs, tag = 'smem constant byte address 0x4 - core index']
  #allocation1 [shape = 'u32[144,128]{1,0:T(1,128)}', space=vmem, size = 0x12000, scoped, tag = 'internal scratch']
  %s0 = inlined_call_operand.hbm [shape: f32[4,128], index: 0, kind: input, shape index: {}]
  %s1 = inlined_call_operand.hbm [shape: f32[4,8], index: 1, kind: input, shape index: {}]
  %s2 = inlined_call_operand.hbm [shape: f32[8,128], index: 2, kind: input, shape index: {}]
  %s3 = inlined_call_operand.hbm [shape: f32[4,128], index: 3, kind: output, shape index: {}]
  %s4 = sld [smem:[#allocation0]]
  $region34: #{tpu_custom_call.1} parent=0
    _
  %s6 = ssub.s32 1, %s4
  %s7 = scalar_select 0, %s6, %s4
  $region1: #{tpu_custom_call.1} parent=0
    #allocation2 [shape = 'u8[2048]{0}', space=vmem, size = 0x800, scoped, tag = 'input window, operand 0, single buffered']
    #allocation3 [shape = 's32[1]{0}', space=sflag, size = 0x4, scoped, tag = 'scoped memory for tpu_custom_call.1']
    #allocation4 [shape = 's32[1]{0}', space=sflag, size = 0x4, scoped, tag = 'scoped memory for tpu_custom_call.1']
    #allocation5 [shape = 'u8[2048]{0}', space=vmem, size = 0x800, scoped, tag = 'input window, operand 1, single buffered']
    #allocation6 [shape = 's32[1]{0}', space=sflag, size = 0x4, scoped, tag = 'scoped memory for tpu_custom_call.1']
    #allocation7 [shape = 'u8[4096]{0}', space=vmem, size = 0x1000, scoped, tag = 'input window, operand 2, single buffered']
    #allocation8 [shape = 'u8[2048]{0}', space=vmem, size = 0x800, scoped, tag = 'output window, operand 0, single buffered']
    %8 = vsyncpa [#allocation3], 0
    %9 = vsyncpa [#allocation6], 0
    %10 = vsyncpa [#allocation4], 0
    // Predicated region
    $region2: #{tpu_custom_call.1} parent=1 // pred_check
      _
    $region3: #{tpu_custom_call.1} parent=1 // pred_check_branch
      %12 = sbr.rel (0) target = $region5
    $region4: #{tpu_custom_call.1} parent=1 // pred_region
      %s14 = ssub.s32 64, 64
      %15 = vsyncadd [#allocation3], %s14
      %s17 = sshll.u32 [#allocation2], 4
      %s18 = int_to_ptr.vmem [resolvable:$true] %s17
      %20 = dma.hbm_to_vmem [thread:$0]  %s0, 64, %s18, [#allocation3]
    $region5: #{tpu_custom_call.1} parent=1 // pred_fallthru
      _
    // Predicated region
    $region6: #{tpu_custom_call.1} parent=1 // pred_check
      _
    $region7: #{tpu_custom_call.1} parent=1 // pred_check_branch
      %22 = sbr.rel (0) target = $region9
    $region8: #{tpu_custom_call.1} parent=1 // pred_region
      %s24 = ssub.s32 64, 64
      %25 = vsyncadd [#allocation6], %s24
      %s27 = sshll.u32 [#allocation5], 4
      %s28 = int_to_ptr.vmem [resolvable:$true] %s27
      %30 = dma.hbm_to_vmem [thread:$0]  %s1, 64, %s28, [#allocation6]
    $region9: #{tpu_custom_call.1} parent=1 // pred_fallthru
      _
    // Predicated region
    $region10: #{tpu_custom_call.1} parent=1 // pred_check
      _
    $region11: #{tpu_custom_call.1} parent=1 // pred_check_branch
      %32 = sbr.rel (0) target = $region13
    $region12: #{tpu_custom_call.1} parent=1 // pred_region
      %s34 = ssub.s32 128, 128
      %35 = vsyncadd [#allocation6], %s34
      %s37 = sshll.u32 [#allocation7], 4
      %s38 = int_to_ptr.vmem [resolvable:$true] %s37
      %40 = dma.hbm_to_vmem [thread:$0]  %s2, 128, %s38, [#allocation6]
    $region13: #{tpu_custom_call.1} parent=1 // pred_fallthru
      _
    // Predicated region
    $region14: #{tpu_custom_call.1} parent=1 // pred_check
      _
    $region15: #{tpu_custom_call.1} parent=1 // pred_check_branch
      %42 = sbr.rel (0) target = $region17
    $region16: #{tpu_custom_call.1} parent=1 // pred_region
      %43 = dma.done [#allocation3], 64
    $region17: #{tpu_custom_call.1} parent=1 // pred_fallthru
      _
    // Predicated region
    $region18: #{tpu_custom_call.1} parent=1 // pred_check
      _
    $region19: #{tpu_custom_call.1} parent=1 // pred_check_branch
      %45 = sbr.rel (0) target = $region21
    $region20: #{tpu_custom_call.1} parent=1 // pred_region
      %46 = dma.done [#allocation6], 64
    $region21: #{tpu_custom_call.1} parent=1 // pred_fallthru
      _
    // Predicated region
    $region22: #{tpu_custom_call.1} parent=1 // pred_check
      _
    $region23: #{tpu_custom_call.1} parent=1 // pred_check_branch
      %48 = sbr.rel (0) target = $region25
    $region24: #{tpu_custom_call.1} parent=1 // pred_region
      %49 = dma.done [#allocation6], 128
    $region25: #{tpu_custom_call.1} parent=1 // pred_fallthru
      _
    %v50 = vld [vmem:[#allocation2] sm:$0xf]
    %v51 = vld [vmem:[#allocation5] sm:$0xf]
    %v52 = vld [vmem:[#allocation7] sm:$0xff]
    %vm53 = vcmask 64512
    %v55 = vsel %vm53, %v51, 0
    %57 = vmatprep.subr.mxu0 0.0
    %58 = vmatpush1.msra.mxu0 0.0
    %59 = vmatprep.subr.mxu0 0.0
    %60 = vmatpush1.msra.mxu0 0.0
    %61 = vmatprep.subr.mxu0 0.0
    %62 = vmatpush1.msra.mxu0 0.0
    %63 = vmatprep.subr.mxu0 0.0
    %64 = vmatpush1.msra.mxu0 0.0
    %65 = vmatprep.subr.mxu0 0.0
    %66 = vmatpush1.msra.mxu0 0.0
    %67 = vmatprep.subr.mxu0 0.0
    %68 = vmatpush1.msra.mxu0 0.0
    %69 = vmatprep.subr.mxu0 0.0
    %70 = vmatpush1.msra.mxu0 0.0
    %71 = vmatprep.subr.mxu0 0.0
    %72 = vmatpush1.msra.mxu0 0.0
    %73 = vmatprep.subr.mxu0 0.0
    %74 = vmatpush1.msra.mxu0 0.0
    %75 = vmatprep.subr.mxu0 0.0
    %76 = vmatpush1.msra.mxu0 0.0
    %77 = vmatprep.subr.mxu0 0.0
    %78 = vmatpush1.msra.mxu0 0.0
    %79 = vmatprep.subr.mxu0 0.0
    %80 = vmatpush1.msra.mxu0 0.0
    %81 = vmatprep.subr.mxu0 0.0
    %82 = vmatpush1.msra.mxu0 0.0
    %83 = vmatprep.subr.mxu0 0.0
    %84 = vmatpush1.msra.mxu0 0.0
    %85 = vmatprep.subr.mxu0 0.0
    %86 = vmatpush1.msra.mxu0 0.0
    %87 = vmatprep.subr.mxu0 0.0
    %88 = vmatpush1.msra.mxu0 %v52
    %89 = vmatprep.subr.mxu0 0.0
    %90 = vmatpush2.msra.mxu0 0.0
    %91 = vmatprep.subr.mxu0 0.0
    %92 = vmatpush2.msra.mxu0 0.0
    %93 = vmatprep.subr.mxu0 0.0
    %94 = vmatpush2.msra.mxu0 0.0
    %95 = vmatprep.subr.mxu0 0.0
    %96 = vmatpush2.msra.mxu0 0.0
    %97 = vmatprep.subr.mxu0 0.0
    %98 = vmatpush2.msra.mxu0 0.0
    %99 = vmatprep.subr.mxu0 0.0
    %100 = vmatpush2.msra.mxu0 0.0
    %101 = vmatprep.subr.mxu0 0.0
    %102 = vmatpush2.msra.mxu0 0.0
    %103 = vmatprep.subr.mxu0 0.0
    %104 = vmatpush2.msra.mxu0 0.0
    %105 = vmatprep.subr.mxu0 0.0
    %106 = vmatpush2.msra.mxu0 0.0
    %107 = vmatprep.subr.mxu0 0.0
    %108 = vmatpush2.msra.mxu0 0.0
    %109 = vmatprep.subr.mxu0 0.0
    %110 = vmatpush2.msra.mxu0 0.0
    %111 = vmatprep.subr.mxu0 0.0
    %112 = vmatpush2.msra.mxu0 0.0
    %113 = vmatprep.subr.mxu0 0.0
    %114 = vmatpush2.msra.mxu0 0.0
    %115 = vmatprep.subr.mxu0 0.0
    %116 = vmatpush2.msra.mxu0 0.0
    %117 = vmatprep.subr.mxu0 0.0
    %118 = vmatpush2.msra.mxu0 0.0
    %119 = vmatprep.subr.mxu0 0.0
    %120 = vmatpush2.msra.mxu0 0.0
    %121 = vmatprep.mubr.f32.mxu0 0.0
    %122 = vmatmul.mubr.f32.gmra.mxu0 %v55
    %v123 = vpop.f32.mrf.mxu0
    %v124 = vadd.f32 0.0, %v123
    %v125 = vpop.f32.mrf.mxu0
    %126 = vdwg.mxu0
    %v127 = vand.u32 2147483647, %v124
    %vm128 = vcmp.le.f32.partialorder %v127, 0.7853982
    %vm129 = vcmp.lt.s32.totalorder %v124, 0
    %v130 = vand.u32 %v124, 2139095040
    %v131 = vshrl.u32 %v130, 23
    %v132 = vsub.s32 %v131, 127
    %v133 = vand.u32 2147483647, %v124
    %v134 = vand.u32 %v133, 8388607
    %v135 = vor.u32 %v134, 8388608
    %v136 = vsub.s32 0, %v135
    %v137 = vadd.s32 %v132, 1
    %vm138 = vcmp.gt.s32.totalorder %v137, 0
    %v139 = vsel %vm138, %v137, 0
    %v140 = vshrl.u32 %v139, 5
    %v141 = vand.u32 %v139, 31
    %v142 = vsub.s32 32, %v141
    %v143 = vshrl.u32 683565275, %v142
    %v144 = vshll.u32 683565275, %v141
    %v145 = vshrl.u32 2475754826, %v142
    %v146 = vor.u32 %v144, %v145
    %v147 = vshll.u32 2475754826, %v141
    %v148 = vshrl.u32 2131351028, %v142
    %v149 = vor.u32 %v147, %v148
    %v150 = vshll.u32 2131351028, %v141
    %v151 = vshrl.u32 2102212464, %v142
    %v152 = vor.u32 %v150, %v151
    %v153 = vshll.u32 2102212464, %v141
    %v154 = vshrl.u32 920167782, %v142
    %v155 = vor.u32 %v153, %v154
    %v156 = vshll.u32 920167782, %v141
    %v157 = vshrl.u32 1326507024, %v142
    %v158 = vor.u32 %v156, %v157
    %vm159 = vcmp.lt.s32.totalorder %v140, 1
    %vm160 = vcmp.lt.s32.totalorder %v140, 2
    %vm161 = vcmp.lt.s32.totalorder %v140, 3
    %vm162 = vcmp.lt.s32.totalorder %v140, 4
    %v163 = vsel %vm159, %v143, %v146
    %v164 = vsel %vm162, %v152, 2102212464
    %v165 = vsel %vm161, %v149, %v164
    %v166 = vsel %vm160, %v163, %v165
    %v167 = vsel %vm159, %v146, %v149
    %v168 = vsel %vm162, %v155, 920167782
    %v169 = vsel %vm161, %v152, %v168
    %v170 = vsel %vm160, %v167, %v169
    %v171 = vsel %vm159, %v149, %v152
    %v172 = vsel %vm162, %v158, 1326507024
    %v173 = vsel %vm161, %v155, %v172
    %v174 = vsel %vm160, %v171, %v173
    %v175 = vshll.u32 %v135, 8
    %v176 = vmul.u32.u64.compose %v175, %v174
    %v177 = vextract.low.u32 %v176
    %v178 = vextract.high.u32 %v176
    %v179 = vmul.u32.u64.compose %v175, %v170
    %v180 = vextract.low.u32 %v179
    %v181 = vextract.high.u32 %v179
    %v182 = vmul.u32 %v175, %v166
    %v183 = vadd.s32 %v178, %v180
    %vm184 = vc.u32 %v178, %v180
    %v185 = vadd.s32 %v181, 1
    %v186 = vsel %vm184, %v185, %v181
    %v187 = vadd.s32 %v182, %v186
    %v188 = vadd.s32 %v187, 536870912
    %v189 = vshrl.u32 %v188, 30
    %v190 = vshll.u32 %v189, 30
    %v191 = vsub.s32 %v187, %v190
    %vm192 = vcmp.lt.s32.totalorder %v191, 0
    %v193 = vsub.s32 0, %v191
    %v194 = vsel %vm192, %v193, %v191
    %v195 = vclz %v194
    %v196 = vsub.s32 %v195, 2
    %vm197 = vcmp.gt.s32.totalorder 0, %v196
    %v198 = vsel %vm197, 0, %v196
    %v199 = vsub.s32 32, %v198
    %v200 = vshll.u32 %v191, %v198
    %v201 = vshrl.u32 %v183, %v199
    %v202 = vor.u32 %v200, %v201
    %v203 = vsub.s32 4294967266, %v198
    %v204 = vadd.s32 %v203, 127
    %v205 = vshll.u32 %v204, 23
    %v206 = vor.u32 4788187, %v205
    %v207 = vand.u32 2147483647, %v206
    %v209 = vcvt.s32.f32 %v202
    %v210 = vmul.f32 %v209, %v207
    %v211 = vxor.u32 %v210, 2147483648
    %v212 = vsel %vm129, %v211, %v210
    %v213 = vsub.s32 4, %v189
    %v214 = vsel %vm129, %v213, %v189
    %v215 = vsel %vm128, %v124, %v212
    %v216 = vsel %vm128, 0, %v214
    %v217 = vcosq.f32.pop %v215
    %v218 = vsinq.f32.pop %v215
    %vm219 = vweird.f32 %v124
    %v220 = vand.u32 %v216, 3
    %vm221 = vcmp.lt.s32.totalorder %v220, 2
    %vm222 = vcmp.eq.s32.totalorder %v220, 0
    %v223 = vxor.u32 %v218, 2147483648
    %v224 = vsel %vm222, %v217, %v223
    %vm225 = vcmp.eq.s32.totalorder %v220, 2
    %v226 = vxor.u32 %v217, 2147483648
    %v227 = vsel %vm225, %v226, %v218
    %v228 = vsel %vm221, %v224, %v227
    %v229 = vsel %vm219, nan, %v228
    %v230 = vand.u32 2147483647, %v124
    %vm231 = vcmp.le.f32.partialorder %v230, 0.7853982
    %vm232 = vcmp.lt.s32.totalorder %v124, 0
    %v233 = vand.u32 %v124, 2139095040
    %v234 = vshrl.u32 %v233, 23
    %v235 = vsub.s32 %v234, 127
    %v236 = vand.u32 2147483647, %v124
    %v237 = vand.u32 %v236, 8388607
    %v238 = vor.u32 %v237, 8388608
    %v239 = vsub.s32 0, %v238
    %v240 = vadd.s32 %v235, 1
    %vm241 = vcmp.gt.s32.totalorder %v240, 0
    %v242 = vsel %vm241, %v240, 0
    %v243 = vshrl.u32 %v242, 5
    %v244 = vand.u32 %v242, 31
    %v245 = vsub.s32 32, %v244
    %v246 = vshrl.u32 683565275, %v245
    %v247 = vshll.u32 683565275, %v244
    %v248 = vshrl.u32 2475754826, %v245
    %v249 = vor.u32 %v247, %v248
    %v250 = vshll.u32 2475754826, %v244
    %v251 = vshrl.u32 2131351028, %v245
    %v252 = vor.u32 %v250, %v251
    %v253 = vshll.u32 2131351028, %v244
    %v254 = vshrl.u32 2102212464, %v245
    %v255 = vor.u32 %v253, %v254
    %v256 = vshll.u32 2102212464, %v244
    %v257 = vshrl.u32 920167782, %v245
    %v258 = vor.u32 %v256, %v257
    %v259 = vshll.u32 920167782, %v244
    %v260 = vshrl.u32 1326507024, %v245
    %v261 = vor.u32 %v259, %v260
    %vm262 = vcmp.lt.s32.totalorder %v243, 1
    %vm263 = vcmp.lt.s32.totalorder %v243, 2
    %vm264 = vcmp.lt.s32.totalorder %v243, 3
    %vm265 = vcmp.lt.s32.totalorder %v243, 4
    %v266 = vsel %vm262, %v246, %v249
    %v267 = vsel %vm265, %v255, 2102212464
    %v268 = vsel %vm264, %v252, %v267
    %v269 = vsel %vm263, %v266, %v268
    %v270 = vsel %vm262, %v249, %v252
    %v271 = vsel %vm265, %v258, 920167782
    %v272 = vsel %vm264, %v255, %v271
    %v273 = vsel %vm263, %v270, %v272
    %v274 = vsel %vm262, %v252, %v255
    %v275 = vsel %vm265, %v261, 1326507024
    %v276 = vsel %vm264, %v258, %v275
    %v277 = vsel %vm263, %v274, %v276
    %v278 = vshll.u32 %v238, 8
    %v279 = vmul.u32.u64.compose %v278, %v277
    %v280 = vextract.low.u32 %v279
    %v281 = vextract.high.u32 %v279
    %v282 = vmul.u32.u64.compose %v278, %v273
    %v283 = vextract.low.u32 %v282
    %v284 = vextract.high.u32 %v282
    %v285 = vmul.u32 %v278, %v269
    %v286 = vadd.s32 %v281, %v283
    %vm287 = vc.u32 %v281, %v283
    %v288 = vadd.s32 %v284, 1
    %v289 = vsel %vm287, %v288, %v284
    %v290 = vadd.s32 %v285, %v289
    %v291 = vadd.s32 %v290, 536870912
    %v292 = vshrl.u32 %v291, 30
    %v293 = vshll.u32 %v292, 30
    %v294 = vsub.s32 %v290, %v293
    %vm295 = vcmp.lt.s32.totalorder %v294, 0
    %v296 = vsub.s32 0, %v294
    %v297 = vsel %vm295, %v296, %v294
    %v298 = vclz %v297
    %v299 = vsub.s32 %v298, 2
    %vm300 = vcmp.gt.s32.totalorder 0, %v299
    %v301 = vsel %vm300, 0, %v299
    %v302 = vsub.s32 32, %v301
    %v303 = vshll.u32 %v294, %v301
    %v304 = vshrl.u32 %v286, %v302
    %v305 = vor.u32 %v303, %v304
    %v306 = vsub.s32 4294967266, %v301
    %v307 = vadd.s32 %v306, 127
    %v308 = vshll.u32 %v307, 23
    %v309 = vor.u32 4788187, %v308
    %v310 = vand.u32 2147483647, %v309
    %v312 = vcvt.s32.f32 %v305
    %v313 = vmul.f32 %v312, %v310
    %v314 = vxor.u32 %v313, 2147483648
    %v315 = vsel %vm232, %v314, %v313
    %v316 = vsub.s32 4, %v292
    %v317 = vsel %vm232, %v316, %v292
    %v318 = vsel %vm231, %v124, %v315
    %v319 = vsel %vm231, 0, %v317
    %v320 = vcosq.f32.pop %v318
    %v321 = vsinq.f32.pop %v318
    %vm322 = vweird.f32 %v124
    %v323 = vadd.s32 %v319, 3
    %v324 = vand.u32 %v323, 3
    %vm325 = vcmp.lt.s32.totalorder %v324, 2
    %vm326 = vcmp.eq.s32.totalorder %v324, 0
    %v327 = vxor.u32 %v321, 2147483648
    %v328 = vsel %vm326, %v320, %v327
    %vm329 = vcmp.eq.s32.totalorder %v324, 2
    %v330 = vxor.u32 %v320, 2147483648
    %v331 = vsel %vm329, %v330, %v321
    %v332 = vsel %vm325, %v328, %v331
    %v333 = vsel %vm322, nan, %v332
    %334 = vrot.lane.b32.xlu0 %v50, 127
    %v335 = vpop.permute.xlu0 %334
    %336 = vrot.lane.b32.xlu0 %v50, 1
    %v337 = vpop.permute.xlu0 %336
    %v338 = vlaneseq
    %v339 = vand.u32 %v338, 127
    %v340 = vand.u32 %v339, 1
    %vm341 = vcmp.eq.s32.totalorder %v340, 0
    %v342 = vsub.f32 0.0, %v335
    %v343 = vsel %vm341, %v342, %v337
    %v344 = vmul.f32 %v229, %v50
    %v345 = vmul.f32 %v333, %v343
    %v346 = vadd.f32 %v344, %v345
    %347 = vst [vmem:[#allocation8] sm:$0xf] %v346
    // Predicated region
    $region26: #{tpu_custom_call.1} parent=1 // pred_check
      _
    $region27: #{tpu_custom_call.1} parent=1 // pred_check_branch
      %349 = sbr.rel (0) target = $region29
    $region28: #{tpu_custom_call.1} parent=1 // pred_region
      %s351 = ssub.s32 64, 64
      %352 = vsyncadd [#allocation4], %s351
      %s354 = sshll.u32 [#allocation8], 4
      %s355 = int_to_ptr.vmem [resolvable:$true] %s354
      %357 = dma.vmem_to_hbm [thread:$0]  %s355, 64, %s3, [#allocation4]
    $region29: #{tpu_custom_call.1} parent=1 // pred_fallthru
      _
    // Predicated region
    $region30: #{tpu_custom_call.1} parent=1 // pred_check
      _
    $region31: #{tpu_custom_call.1} parent=1 // pred_check_branch
      %359 = sbr.rel (0) target = $region33
    $region32: #{tpu_custom_call.1} parent=1 // pred_region
      %360 = dma.done [#allocation4], 64
    $region33: #{tpu_custom_call.1} parent=1 // pred_fallthru
      _
    %361 = vsyncpa [#allocation3], 1
    %362 = vsyncpa [#allocation6], 1
    %363 = vsyncpa [#allocation4], 1

</llo_original>
